<compile_context>
chip_gen: v6e
topology: v6e:2x2x1
jax: 0.10.0
libtpu: 0.0.40
codegen_flags: <defaults>
</compile_context>

<pallas_src>
import jax
import jax.numpy as jnp
from jax.experimental import pallas as pl
from jax.experimental.pallas import tpu as pltpu


def _copy_kernel(x_ref, o_ref):
    # Plain lane-dense tile copy (unmasked vld/vst).
    o_ref[...] = x_ref[...]


def _lane_dense_copy(x2d: jnp.ndarray) -> jnp.ndarray:
    """Tiled, lane-dense identity copy through VMEM (pipelined over rows)."""
    R, C = x2d.shape
    itemsize = jnp.dtype(x2d.dtype).itemsize
    cost = pl.CostEstimate(
        flops=0, transcendentals=0, bytes_accessed=2 * R * C * itemsize
    )

    if (R % 8 == 0) and (C % 128 == 0):
        # Largest row-tile that divides R while keeping the double-buffered
        # (in + out) working set well under v7x's 32 MiB scoped-VMEM default:
        # 4 buffers x tile_bytes <= ~16 MiB  ->  per-tile cap of 4 MiB.
        byte_cap = 4 * 1024 * 1024
        tr = 8
        for cand in (1024, 512, 256, 128, 64, 32, 16, 8):
            if R % cand == 0 and cand * C * itemsize <= byte_cap:
                tr = cand
                break
        return pl.pallas_call(
            _copy_kernel,
            out_shape=jax.ShapeDtypeStruct((R, C), x2d.dtype),
            grid=(R // tr,),
            in_specs=[pl.BlockSpec((tr, C), lambda i: (i, 0))],
            out_specs=pl.BlockSpec((tr, C), lambda i: (i, 0)),
            compiler_params=pltpu.CompilerParams(
                dimension_semantics=("parallel",)
            ),
            cost_estimate=cost,
        )(x2d)

    # Small / irregular shapes: single full-array block (block dims equal the
    # array dims, so the (8, 128) divisibility constraint does not apply).
    return pl.pallas_call(
        _copy_kernel,
        out_shape=jax.ShapeDtypeStruct((R, C), x2d.dtype),
        in_specs=[pl.BlockSpec((R, C), lambda: (0, 0))],
        out_specs=pl.BlockSpec((R, C), lambda: (0, 0)),
        cost_estimate=cost,
    )(x2d)


def squeeze(x: jnp.ndarray, dim: int = -1) -> jnp.ndarray:
    """Pallas equivalent of Squeeze(dim).forward(x)."""
    ndim = x.ndim
    axis = dim % ndim

    if x.shape[axis] != 1:
        # torch.squeeze(dim=d) is the identity when that dim isn't size 1:
        # return the input unchanged (zero HBM traffic, true no-op).
        return x

    # The squeeze itself is a pure metadata reshape (free). Keep a lane-dense
    # Pallas identity-copy kernel in the path as a fusion anchor.
    new_shape = tuple(s for i, s in enumerate(x.shape) if i != axis)
    squeezed = x.reshape(new_shape)

    if squeezed.ndim == 0:
        # TODO(synk): 0-d result (squeezing a (1,) input) is returned as the
        # metadata reshape only; a Pallas kernel adds nothing for a scalar.
        return squeezed

    cols = squeezed.shape[-1]
    rows = 1
    for s in squeezed.shape[:-1]:
        rows *= s
    out2d = _lane_dense_copy(squeezed.reshape(rows, cols))
    return out2d.reshape(new_shape)


if __name__ == "__main__":
    key = jax.random.PRNGKey(0)

    # Shape consistent with IQL's usage: Squeeze(dim=-1) after Linear(..., 1),
    # i.e. a trailing size-1 axis.  Small demo shape: (8, 128, 1).
    x = jax.random.normal(key, (8, 128, 1), dtype=jnp.float32)
    y = jax.block_until_ready(squeeze(x, dim=-1))
    ref = jnp.squeeze(x, axis=-1)
    assert y.shape == ref.shape == (8, 128), (y.shape, ref.shape)
    assert y.dtype == x.dtype
    assert bool(jnp.allclose(y, ref))

    # No-op branch: dim size != 1 -> input returned unchanged (true no-op).
    x2 = jax.random.normal(jax.random.PRNGKey(1), (8, 128), dtype=jnp.float32)
    y2 = jax.block_until_ready(squeeze(x2, dim=-1))
    assert y2.shape == x2.shape
    assert bool(jnp.allclose(y2, x2))

    # Non-trailing dim: metadata squeeze + tiled lane-dense copy.
    x3 = jax.random.normal(jax.random.PRNGKey(2), (8, 1, 128), dtype=jnp.float32)
    y3 = jax.block_until_ready(squeeze(x3, dim=1))
    assert y3.shape == (8, 128)
    assert bool(jnp.allclose(y3, jnp.squeeze(x3, axis=1)))

    # IQL's actual post-Linear(…,1) shape: (batch, 1) -> (batch,).
    x4 = jax.random.normal(jax.random.PRNGKey(3), (32, 1), dtype=jnp.float32)
    y4 = jax.block_until_ready(squeeze(x4, dim=-1))
    assert y4.shape == (32,)
    assert bool(jnp.allclose(y4, jnp.squeeze(x4, axis=-1)))

    print("KERNEL_OK")
</pallas_src>

<mosaic_0001>
module attributes {stable_mosaic.version = 11 : i64} {
  func.func @_copy_kernel(%arg0: i32, %arg1: memref<8x128xf32, #tpu.memory_space<vmem>>, %arg2: memref<8x128xf32, #tpu.memory_space<vmem>>) attributes {dimension_semantics = [#tpu.dimension_semantics<parallel>], iteration_bounds = array<i64: 1>, scalar_prefetch = 0 : i64, scratch_operands = 0 : i64, tpu.core_type = #tpu.core_type<tc>, window_params = [{transform_indices = @transform_0, window_bounds = array<i64: 8, 128>}, {transform_indices = @transform_1, window_bounds = array<i64: 8, 128>}]} {
    %c0 = arith.constant 0 : index
    %c0_0 = arith.constant 0 : index
    %0 = vector.load %arg1[%c0, %c0_0] : memref<8x128xf32, #tpu.memory_space<vmem>>, vector<8x128xf32>
    %c0_1 = arith.constant 0 : index
    %c0_2 = arith.constant 0 : index
    %1 = vector.load %arg2[%c0_1, %c0_2] : memref<8x128xf32, #tpu.memory_space<vmem>>, vector<8x128xf32>
    tpu.vector_store %arg2[%c0_1, %c0_2], %0 {strides = array<i32>} : memref<8x128xf32, #tpu.memory_space<vmem>>, vector<8x128xf32>,
    return
  }
  func.func @transform_0(%arg0: i32) -> (i32, i32) {
    %c0_i32 = arith.constant 0 : i32
    %c0_i32_0 = arith.constant 0 : i32
    return %arg0, %c0_i32 : i32, i32
  }
  func.func @transform_1(%arg0: i32) -> (i32, i32) {
    %c0_i32 = arith.constant 0 : i32
    %c0_i32_0 = arith.constant 0 : i32
    return %arg0, %c0_i32 : i32, i32
  }
}

</mosaic_0001>

<llo_original>
// kernel: tpu_custom_call.1
$region0: #{tpu_custom_call.1}
  #allocation0 [shape = 'u32[]', space=smem, size = 0x4, offset = 0x4, fixed_abs, tag = 'smem constant byte address 0x4 - core index']
  #allocation1 [shape = 'u32[144,128]{1,0:T(1,128)}', space=vmem, size = 0x12000, scoped, tag = 'internal scratch']
  %s0 = inlined_call_operand.hbm [shape: f32[8,128], index: 0, kind: input, shape index: {}]
  %s1 = inlined_call_operand.hbm [shape: f32[8,128], index: 1, kind: output, shape index: {}]
  %s2 = sld [smem:[#allocation0]]
  $region18: #{tpu_custom_call.1} parent=0
    _
  %s4 = ssub.s32 1, %s2
  %s5 = scalar_select 0, %s4, %s2
  $region1: #{tpu_custom_call.1} parent=0
    #allocation2 [shape = 'u8[4096]{0}', space=vmem, size = 0x1000, scoped, tag = 'input window, operand 0, single buffered']
    #allocation3 [shape = 's32[1]{0}', space=sflag, size = 0x4, scoped, tag = 'scoped memory for tpu_custom_call.1']
    #allocation4 [shape = 's32[1]{0}', space=sflag, size = 0x4, scoped, tag = 'scoped memory for tpu_custom_call.1']
    #allocation5 [shape = 'u8[4096]{0}', space=vmem, size = 0x1000, scoped, tag = 'output window, operand 0, single buffered']
    %6 = vsyncpa [#allocation3], 0
    %7 = vsyncpa [#allocation4], 0
    // Predicated region
    $region2: #{tpu_custom_call.1} parent=1 // pred_check
      _
    $region3: #{tpu_custom_call.1} parent=1 // pred_check_branch
      %9 = sbr.rel (0) target = $region5
    $region4: #{tpu_custom_call.1} parent=1 // pred_region
      %s11 = ssub.s32 128, 128
      %12 = vsyncadd [#allocation3], %s11
      %s14 = sshll.u32 [#allocation2], 4
      %s15 = int_to_ptr.vmem [resolvable:$true] %s14
      %17 = dma.hbm_to_vmem [thread:$0]  %s0, 128, %s15, [#allocation3]
    $region5: #{tpu_custom_call.1} parent=1 // pred_fallthru
      _
    // Predicated region
    $region6: #{tpu_custom_call.1} parent=1 // pred_check
      _
    $region7: #{tpu_custom_call.1} parent=1 // pred_check_branch
      %19 = sbr.rel (0) target = $region9
    $region8: #{tpu_custom_call.1} parent=1 // pred_region
      %20 = dma.done [#allocation3], 128
    $region9: #{tpu_custom_call.1} parent=1 // pred_fallthru
      _
    %v21 = vld [vmem:[#allocation2] sm:$0xff]
    %22 = vst [vmem:[#allocation5] sm:$0xff] %v21
    // Predicated region
    $region10: #{tpu_custom_call.1} parent=1 // pred_check
      _
    $region11: #{tpu_custom_call.1} parent=1 // pred_check_branch
      %24 = sbr.rel (0) target = $region13
    $region12: #{tpu_custom_call.1} parent=1 // pred_region
      %s26 = ssub.s32 128, 128
      %27 = vsyncadd [#allocation4], %s26
      %s29 = sshll.u32 [#allocation5], 4
      %s30 = int_to_ptr.vmem [resolvable:$true] %s29
      %32 = dma.vmem_to_hbm [thread:$0]  %s30, 128, %s1, [#allocation4]
    $region13: #{tpu_custom_call.1} parent=1 // pred_fallthru
      _
    // Predicated region
    $region14: #{tpu_custom_call.1} parent=1 // pred_check
      _
    $region15: #{tpu_custom_call.1} parent=1 // pred_check_branch
      %34 = sbr.rel (0) target = $region17
    $region16: #{tpu_custom_call.1} parent=1 // pred_region
      %35 = dma.done [#allocation4], 128
    $region17: #{tpu_custom_call.1} parent=1 // pred_fallthru
      _
    %36 = vsyncpa [#allocation3], 1
    %37 = vsyncpa [#allocation4], 1

</llo_original>
